<compile_context>
chip_gen: v7x
topology: tpu7x:2x2x1
jax: 0.10.0
libtpu: 0.0.40
codegen_flags: <defaults>
</compile_context>

<pallas_src>
import functools

import jax
import jax.numpy as jnp
from jax import lax
from jax.experimental import pallas as pl
from jax.experimental.pallas import tpu as pltpu

_MIB = 1024 * 1024


# ---------------------------------------------------------------------------
# Helpers
# ---------------------------------------------------------------------------
def _round_up(x: int, m: int) -> int:
    return ((x + m - 1) // m) * m


def _device_kind() -> str:
    try:
        return jax.devices()[0].device_kind.lower()
    except Exception:  # pragma: no cover
        return ""


def _default_vmem_limit_bytes() -> int:
    """Generation-aware scoped-VMEM limit (v7x only has 64 MiB physical)."""
    cap = None
    try:
        cap = int(pltpu.get_tpu_info().vmem_capacity_bytes)
    except Exception:
        cap = None
    if not cap:
        cap = (64 if "v7" in _device_kind() else 128) * _MIB
    return min(48 * _MIB, int(0.6 * cap))


def _default_group_block_bytes() -> int:
    # Cap per-input block bytes on v7x (64 MiB VMEM); v5e/v6e can go larger.
    return 2 * _MIB if "v7" in _device_kind() else 4 * _MIB


def _pick_tile(dim: int, target: int, align: int) -> int:
    """Largest tile <= target that is a multiple of `align` and divides `dim`.

    `dim` is already a multiple of `align` (wrapper pre-pads), so this always
    terminates at >= align; there is no full-extent fallback.
    """
    if dim <= target:
        return dim
    t = max(align, (target // align) * align)
    while dim % t:
        t -= align
    return t


def _pick_k_tile(kp: int, target: int) -> int:
    """K tile: prefer 256-deep multiples (v6e/v7x MXU contracts in 256 passes)."""
    target = max(target, 128)
    if kp <= target:
        return kp
    for cand in (512, 256, 384, 128):
        if cand <= target and kp % cand == 0:
            return cand
    return _pick_tile(kp, target, 128)


# ---------------------------------------------------------------------------
# split_size == 1 : tiled (M, K) x (N, K) -> (M, N), contracting on K
# ---------------------------------------------------------------------------
def _matmul_kernel_f32out(ctx_ref, rep_ref, out_ref, *, cast_dtype):
    """f32 output: accumulate directly into the K-resident output block."""

    @pl.when(pl.program_id(2) == 0)
    def _():
        out_ref[...] = jnp.zeros_like(out_ref)

    a = ctx_ref[...]
    b = rep_ref[...]
    if cast_dtype is not None:
        a = a.astype(cast_dtype)
        b = b.astype(cast_dtype)
    out_ref[...] += lax.dot_general(
        a, b,
        dimension_numbers=(((1,), (1,)), ((), ())),
        preferred_element_type=jnp.float32,
    )


def _matmul_kernel_generic(ctx_ref, rep_ref, out_ref, acc_ref, *, cast_dtype):
    """Non-f32 output: f32 scratch accumulator + final cast."""

    @pl.when(pl.program_id(2) == 0)
    def _():
        acc_ref[...] = jnp.zeros_like(acc_ref)

    a = ctx_ref[...]
    b = rep_ref[...]
    if cast_dtype is not None:
        a = a.astype(cast_dtype)
        b = b.astype(cast_dtype)
    acc_ref[...] += lax.dot_general(
        a, b,
        dimension_numbers=(((1,), (1,)), ((), ())),
        preferred_element_type=jnp.float32,
    )

    @pl.when(pl.program_id(2) == pl.num_programs(2) - 1)
    def _():
        out_ref[...] = acc_ref[...].astype(out_ref.dtype)


def _similarity_matmul(ctx, rep, *, out_dtype, cast_dtype, tm, tn, tk,
                       vmem_limit_bytes):
    m, k = ctx.shape
    n = rep.shape[0]
    tm, tn, tk = max(tm, 8), max(tn, 128), max(tk, 128)

    # Pad to sublane/lane friendly extents (never produce full-extent blocks
    # for non-divisible shapes); padded K columns are zero so the result is
    # exact, padded M/N rows/cols are sliced off.
    mp, np_, kp = _round_up(m, 8), _round_up(n, 128), _round_up(k, 128)
    bm = _pick_tile(mp, tm, 8)
    bn = _pick_tile(np_, tn, 128)   # output lane dim + rhs sublane dim
    bk = _pick_k_tile(kp, tk)       # lane dim of both input blocks

    if (mp, kp) != (m, k):
        ctx = jnp.pad(ctx, ((0, mp - m), (0, kp - k)))
    if (np_, kp) != (n, k):
        rep = jnp.pad(rep, ((0, np_ - n), (0, kp - k)))

    grid = (mp // bm, np_ // bn, kp // bk)

    if jnp.dtype(out_dtype) == jnp.float32:
        kernel = functools.partial(_matmul_kernel_f32out, cast_dtype=cast_dtype)
        scratch = []
    else:
        kernel = functools.partial(_matmul_kernel_generic, cast_dtype=cast_dtype)
        scratch = [pltpu.VMEM((bm, bn), jnp.float32)]

    out = pl.pallas_call(
        kernel,
        out_shape=jax.ShapeDtypeStruct((mp, np_), out_dtype),
        grid_spec=pltpu.PrefetchScalarGridSpec(
            num_scalar_prefetch=0,
            grid=grid,
            in_specs=[
                pl.BlockSpec((bm, bk), lambda i, j, kk: (i, kk)),
                pl.BlockSpec((bn, bk), lambda i, j, kk: (j, kk)),
            ],
            out_specs=pl.BlockSpec((bm, bn), lambda i, j, kk: (i, j)),
            scratch_shapes=scratch,
        ),
        compiler_params=pltpu.CompilerParams(
            dimension_semantics=("parallel", "parallel", "arbitrary"),
            vmem_limit_bytes=vmem_limit_bytes,
        ),
    )(ctx, rep)

    if (mp, np_) != (m, n):
        out = out[:m, :n]
    return out


# ---------------------------------------------------------------------------
# split_size > 1 : batched per-group matmul, many groups per grid step
# ---------------------------------------------------------------------------
def _grouped_kernel(ctx_ref, rep_ref, out_ref, *, cast_dtype):
    """ctx/rep blocks: (GB, split, hidden) -> out block: (GB, split, split)."""
    a = ctx_ref[...]
    b = rep_ref[...]
    if cast_dtype is not None:
        a = a.astype(cast_dtype)
        b = b.astype(cast_dtype)
    sim = lax.dot_general(
        a, b,
        dimension_numbers=(((2,), (2,)), ((0,), (0,))),
        preferred_element_type=jnp.float32,
    )
    out_ref[...] = sim.astype(out_ref.dtype)


def _grouped_similarity(ctx3, rep3, *, out_dtype, cast_dtype,
                        target_block_bytes, vmem_limit_bytes):
    groups, split, hidden = ctx3.shape
    per_group = split * hidden * ctx3.dtype.itemsize
    gb = int(max(1, min(groups, 512, target_block_bytes // max(per_group, 1))))

    # Pad groups up to a multiple of gb (instead of shrinking gb toward 1 for
    # prime-ish group counts); padded groups compute zeros and are sliced off.
    gp = _round_up(groups, gb)
    if gp != groups:
        pad = ((0, gp - groups), (0, 0), (0, 0))
        ctx3 = jnp.pad(ctx3, pad)
        rep3 = jnp.pad(rep3, pad)
    grid = (gp // gb,)

    out = pl.pallas_call(
        functools.partial(_grouped_kernel, cast_dtype=cast_dtype),
        out_shape=jax.ShapeDtypeStruct((gp, split, split), out_dtype),
        grid_spec=pltpu.PrefetchScalarGridSpec(
            num_scalar_prefetch=0,
            grid=grid,
            in_specs=[
                pl.BlockSpec((gb, split, hidden), lambda g: (g, 0, 0)),
                pl.BlockSpec((gb, split, hidden), lambda g: (g, 0, 0)),
            ],
            out_specs=pl.BlockSpec((gb, split, split), lambda g: (g, 0, 0)),
        ),
        compiler_params=pltpu.CompilerParams(
            dimension_semantics=("parallel",),
            vmem_limit_bytes=vmem_limit_bytes,
        ),
    )(ctx3, rep3)

    if gp != groups:
        out = out[:groups]
    return out


# ---------------------------------------------------------------------------
# Public wrapper: matches ConveRTCosineLoss.forward semantics
# ---------------------------------------------------------------------------
def convert_cosine_loss(context_embed: jax.Array,
                        reply_embed: jax.Array,
                        split_size: int = 1,
                        *,
                        compute_dtype=None,
                        tm: int = 512,
                        tn: int = 512,
                        tk: int = 512,
                        group_block_bytes: int | None = None,
                        vmem_limit_bytes: int | None = None) -> jax.Array:
    """Pallas equivalent of ConveRTCosineLoss.forward (similarity matrix only).

    compute_dtype: optional in-kernel cast of MXU operands (e.g. jnp.bfloat16
    for full MXU rate on v6e/v7x).  Accumulation stays float32 and the output
    keeps the input dtype, but bf16 numerics differ from the torch f32 module
    -- it is an explicit opt-in.  Default (None) is exact f32.
    """
    assert context_embed.ndim == 2 and reply_embed.ndim == 2
    assert context_embed.shape[0] == reply_embed.shape[0]
    out_dtype = context_embed.dtype
    batch = context_embed.shape[0]

    if vmem_limit_bytes is None:
        vmem_limit_bytes = _default_vmem_limit_bytes()

    if split_size > 1:
        assert batch % split_size == 0
        groups = batch // split_size
        if group_block_bytes is None:
            group_block_bytes = _default_group_block_bytes()
        ctx3 = context_embed.reshape(groups, split_size, -1)
        rep3 = reply_embed.reshape(groups, split_size, -1)
        return _grouped_similarity(
            ctx3, rep3, out_dtype=out_dtype, cast_dtype=compute_dtype,
            target_block_bytes=group_block_bytes,
            vmem_limit_bytes=vmem_limit_bytes,
        )

    return _similarity_matmul(
        context_embed, reply_embed, out_dtype=out_dtype,
        cast_dtype=compute_dtype, tm=tm, tn=tn, tk=tk,
        vmem_limit_bytes=vmem_limit_bytes,
    )


if __name__ == "__main__":
    key = jax.random.PRNGKey(0)
    k_ctx, k_rep = jax.random.split(key)
    HI = lax.Precision.HIGHEST

    # --- small shapes, both paths --------------------------------------
    batch, hidden = 8, 32
    context_embed = jax.random.normal(k_ctx, (batch, hidden), dtype=jnp.float32)
    reply_embed = jax.random.normal(k_rep, (batch, hidden), dtype=jnp.float32)

    # split_size = 1: (B, D) @ (D, B) -> (B, B)
    sim = jax.block_until_ready(
        convert_cosine_loss(context_embed, reply_embed, split_size=1))
    ref = jnp.matmul(context_embed, reply_embed.T, precision=HI)
    assert sim.shape == (batch, batch)
    assert jnp.allclose(sim, ref, atol=1e-4, rtol=1e-4)

    # split_size = 2: (B//2, 2, D) batched matmul -> (B//2, 2, 2)
    sim2 = jax.block_until_ready(
        convert_cosine_loss(context_embed, reply_embed, split_size=2))
    ctx_v = context_embed.reshape(batch // 2, 2, hidden)
    rep_v = reply_embed.reshape(batch // 2, 2, hidden)
    ref2 = jnp.einsum("gsd,gtd->gst", ctx_v, rep_v, precision=HI)
    assert sim2.shape == (batch // 2, 2, 2)
    assert jnp.allclose(sim2, ref2, atol=1e-4, rtol=1e-4)

    # --- larger shapes to exercise multi-tile grid + K accumulation -----
    kb_ctx, kb_rep = jax.random.split(jax.random.PRNGKey(1))
    big_b, big_h = 512, 1024
    big_ctx = jax.random.normal(kb_ctx, (big_b, big_h), dtype=jnp.float32)
    big_rep = jax.random.normal(kb_rep, (big_b, big_h), dtype=jnp.float32)

    big_sim = jax.block_until_ready(
        convert_cosine_loss(big_ctx, big_rep, split_size=1))
    big_ref = jnp.matmul(big_ctx, big_rep.T, precision=HI)
    assert big_sim.shape == (big_b, big_b)
    assert jnp.allclose(big_sim, big_ref, atol=1e-3, rtol=1e-3)

    # opt-in bf16 MXU operands (loose tolerance: bf16 numerics differ from f32)
    bf_sim = jax.block_until_ready(
        convert_cosine_loss(big_ctx, big_rep, split_size=1,
                            compute_dtype=jnp.bfloat16))
    assert bf_sim.shape == (big_b, big_b)
    assert jnp.allclose(bf_sim, big_ref, atol=2.0, rtol=5e-2)

    # grouped path with many groups per grid step
    split = 8
    gsim = jax.block_until_ready(
        convert_cosine_loss(big_ctx, big_rep, split_size=split))
    gref = jnp.einsum(
        "gsd,gtd->gst",
        big_ctx.reshape(big_b // split, split, big_h),
        big_rep.reshape(big_b // split, split, big_h),
        precision=HI)
    assert gsim.shape == (big_b // split, split, split)
    assert jnp.allclose(gsim, gref, atol=1e-3, rtol=1e-3)

    # --- non-divisible shapes (exercise padding, no full-extent fallback) --
    kn_ctx, kn_rep = jax.random.split(jax.random.PRNGKey(2))
    nb, nh = 200, 300
    n_ctx = jax.random.normal(kn_ctx, (nb, nh), dtype=jnp.float32)
    n_rep = jax.random.normal(kn_rep, (nb, nh), dtype=jnp.float32)
    n_sim = jax.block_until_ready(
        convert_cosine_loss(n_ctx, n_rep, split_size=1))
    n_ref = jnp.matmul(n_ctx, n_rep.T, precision=HI)
    assert n_sim.shape == (nb, nb)
    assert jnp.allclose(n_sim, n_ref, atol=1e-3, rtol=1e-3)

    # --- grouped path with group-count padding (gb does not divide groups) --
    kg_ctx, kg_rep = jax.random.split(jax.random.PRNGKey(3))
    gbatch, gsplit, ghid = 40, 4, 32
    g_ctx = jax.random.normal(kg_ctx, (gbatch, ghid), dtype=jnp.float32)
    g_rep = jax.random.normal(kg_rep, (gbatch, ghid), dtype=jnp.float32)
    per_group_bytes = gsplit * ghid * 4
    g_sim = jax.block_until_ready(
        convert_cosine_loss(g_ctx, g_rep, split_size=gsplit,
                            group_block_bytes=3 * per_group_bytes))
    g_ref = jnp.einsum(
        "gsd,gtd->gst",
        g_ctx.reshape(gbatch // gsplit, gsplit, ghid),
        g_rep.reshape(gbatch // gsplit, gsplit, ghid),
        precision=HI)
    assert g_sim.shape == (gbatch // gsplit, gsplit, gsplit)
    assert jnp.allclose(g_sim, g_ref, atol=1e-4, rtol=1e-4)

    print("KERNEL_OK")
</pallas_src>

<mosaic_0001>
module attributes {stable_mosaic.version = 11 : i64} {
  func.func @_matmul_kernel_f32out(%arg0: i32, %arg1: i32, %arg2: i32, %arg3: memref<8x128xf32, #tpu.memory_space<vmem>>, %arg4: memref<128x128xf32, #tpu.memory_space<vmem>>, %arg5: memref<8x128xf32, #tpu.memory_space<vmem>>) attributes {dimension_semantics = [#tpu.dimension_semantics<parallel>, #tpu.dimension_semantics<parallel>, #tpu.dimension_semantics<arbitrary>], iteration_bounds = array<i64: 1, 1, 1>, scalar_prefetch = 0 : i64, scratch_operands = 0 : i64, tpu.core_type = #tpu.core_type<tc>, window_params = [{transform_indices = @transform_0, window_bounds = array<i64: 8, 128>}, {transform_indices = @transform_1, window_bounds = array<i64: 128, 128>}, {transform_indices = @transform_2, window_bounds = array<i64: 8, 128>}]} {
    %c0_i32 = arith.constant 0 : i32
    %0 = arith.cmpi eq, %arg2, %c0_i32 : i32
    %1 = arith.extui %0 : i1 to i32
    %c0_i32_0 = arith.constant 0 : i32
    %2 = arith.cmpi ne, %1, %c0_i32_0 : i32
    scf.if %2 {
      %cst_8 = arith.constant 0.000000e+00 : f32
      %9 = vector.broadcast %cst_8 : f32 to vector<8x128xf32>
      %c0_9 = arith.constant 0 : index
      %c0_10 = arith.constant 0 : index
      %10 = vector.load %arg5[%c0_9, %c0_10] : memref<8x128xf32, #tpu.memory_space<vmem>>, vector<8x128xf32>
      tpu.vector_store %arg5[%c0_9, %c0_10], %9 {strides = array<i32>} : memref<8x128xf32, #tpu.memory_space<vmem>>, vector<8x128xf32>,
    } else {
    }
    %c0 = arith.constant 0 : index
    %c0_1 = arith.constant 0 : index
    %3 = vector.load %arg3[%c0, %c0_1] : memref<8x128xf32, #tpu.memory_space<vmem>>, vector<8x128xf32>
    %c0_2 = arith.constant 0 : index
    %c0_3 = arith.constant 0 : index
    %4 = vector.load %arg4[%c0_2, %c0_3] : memref<128x128xf32, #tpu.memory_space<vmem>>, vector<128x128xf32>
    %c0_4 = arith.constant 0 : index
    %c0_5 = arith.constant 0 : index
    %5 = vector.load %arg5[%c0_4, %c0_5] : memref<8x128xf32, #tpu.memory_space<vmem>>, vector<8x128xf32>
    %cst = arith.constant dense<0.000000e+00> : vector<8x128xf32>
    %6 = tpu.matmul %3, %4, %cst {dimension_numbers = #tpu.dot_dimension_numbers<[1], [1], [0], [0], [0, 0, 1, 0], [], []>} : vector<8x128xf32>, vector<128x128xf32>, vector<8x128xf32> -> vector<8x128xf32>
    %7 = arith.addf %5, %6 : vector<8x128xf32>
    %c0_6 = arith.constant 0 : index
    %c0_7 = arith.constant 0 : index
    %8 = vector.load %arg5[%c0_6, %c0_7] : memref<8x128xf32, #tpu.memory_space<vmem>>, vector<8x128xf32>
    tpu.vector_store %arg5[%c0_6, %c0_7], %7 {strides = array<i32>} : memref<8x128xf32, #tpu.memory_space<vmem>>, vector<8x128xf32>,
    return
  }
  func.func @transform_0(%arg0: i32, %arg1: i32, %arg2: i32) -> (i32, i32) {
    %c0_i32 = arith.constant 0 : i32
    return %arg0, %arg2 : i32, i32
  }
  func.func @transform_1(%arg0: i32, %arg1: i32, %arg2: i32) -> (i32, i32) {
    %c0_i32 = arith.constant 0 : i32
    return %arg1, %arg2 : i32, i32
  }
  func.func @transform_2(%arg0: i32, %arg1: i32, %arg2: i32) -> (i32, i32) {
    %c0_i32 = arith.constant 0 : i32
    return %arg0, %arg1 : i32, i32
  }
}

</mosaic_0001>

<llo_original>
// kernel: tpu_custom_call.1
$region0: #{tpu_custom_call.1}
  #allocation0 [shape = 'u32[]', space=smem, size = 0x4, offset = 0x4, fixed_abs, tag = 'smem constant byte address 0x4 - core index']
  #allocation1 [shape = 'u32[144,128]{1,0:T(1,128)}', space=vmem, size = 0x12000, scoped, tag = 'internal scratch']
  %s0 = inlined_call_operand.hbm [shape: f32[8,128], index: 0, kind: input, shape index: {}]
  %s1 = inlined_call_operand.hbm [shape: f32[128,128], index: 1, kind: input, shape index: {}]
  %s2 = inlined_call_operand.hbm [shape: f32[8,128], index: 2, kind: output, shape index: {}]
  %s3 = sld [smem:[#allocation0]]
  $region30: #{tpu_custom_call.1} parent=0
    _
  %s5 = ssub.s32 1, %s3
  %s6 = scalar_select 0, %s5, %s3
  $region1: #{tpu_custom_call.1} parent=0
    #allocation2 [shape = 'u8[4096]{0}', space=vmem, size = 0x1000, scoped, tag = 'input window, operand 0, single buffered']
    #allocation3 [shape = 's32[1]{0}', space=sflag, size = 0x4, scoped, tag = 'scoped memory for tpu_custom_call.1']
    #allocation4 [shape = 's32[1]{0}', space=sflag, size = 0x4, scoped, tag = 'scoped memory for tpu_custom_call.1']
    #allocation5 [shape = 'u8[65536]{0}', space=vmem, size = 0x10000, scoped, tag = 'input window, operand 1, single buffered']
    #allocation6 [shape = 's32[1]{0}', space=sflag, size = 0x4, scoped, tag = 'scoped memory for tpu_custom_call.1']
    #allocation7 [shape = 'u8[4096]{0}', space=vmem, size = 0x1000, scoped, tag = 'output window, operand 0, single buffered']
    %7 = vsyncpa [#allocation3], 0
    %8 = vsyncpa [#allocation6], 0
    %9 = vsyncpa [#allocation4], 0
    // Predicated region
    $region2: #{tpu_custom_call.1} parent=1 // pred_check
      _
    $region3: #{tpu_custom_call.1} parent=1 // pred_check_branch
      %11 = sbr.rel (0) target = $region5
    $region4: #{tpu_custom_call.1} parent=1 // pred_region
      %s13 = ssub.s32 128, 128
      %14 = vsyncadd [#allocation3], %s13
      %s16 = sshll.u32 [#allocation2], 4
      %s17 = int_to_ptr.vmem [resolvable:$true] %s16
      %19 = dma.hbm_to_vmem [thread:$0]  %s0, 128, %s17, [#allocation3]
    $region5: #{tpu_custom_call.1} parent=1 // pred_fallthru
      _
    // Predicated region
    $region6: #{tpu_custom_call.1} parent=1 // pred_check
      _
    $region7: #{tpu_custom_call.1} parent=1 // pred_check_branch
      %21 = sbr.rel (0) target = $region9
    $region8: #{tpu_custom_call.1} parent=1 // pred_region
      %s23 = ssub.s32 2048, 2048
      %24 = vsyncadd [#allocation6], %s23
      %s25 = sshll.u32 [#allocation5], 4
      %s26 = int_to_ptr.vmem [resolvable:$true] %s25
      %31 = dma.hbm_to_vmem [thread:$0]  %s1, 2048, %s26, [#allocation6], 128, 128, 8
    $region9: #{tpu_custom_call.1} parent=1 // pred_fallthru
      _
    // Predicated region
    $region10: #{tpu_custom_call.1} parent=1 // pred_check
      _
    $region11: #{tpu_custom_call.1} parent=1 // pred_check_branch
      %33 = sbr.rel (0) target = $region13
    $region12: #{tpu_custom_call.1} parent=1 // pred_region
      %34 = dma.done [#allocation3], 128
    $region13: #{tpu_custom_call.1} parent=1 // pred_fallthru
      _
    // Predicated region
    $region14: #{tpu_custom_call.1} parent=1 // pred_check
      _
    $region15: #{tpu_custom_call.1} parent=1 // pred_check_branch
      %36 = sbr.rel (0) target = $region17
    $region16: #{tpu_custom_call.1} parent=1 // pred_region
      %37 = dma.done [#allocation6], 2048
    $region17: #{tpu_custom_call.1} parent=1 // pred_fallthru
      _
    %p38 = scmp.eq.s32.totalorder 0, 0
    // Predicated region
    $region18: #{tpu_custom_call.1} parent=1 // pred_check
      %p39 = pneg %p38
    $region19: #{tpu_custom_call.1} parent=1 // pred_check_branch
      %41 = sbr.rel (%p39) target = $region21
    $region20: #{tpu_custom_call.1} parent=1 // pred_region
      %42 = vst [vmem:[#allocation7] sm:$0xff] 0.0
    $region21: #{tpu_custom_call.1} parent=1 // pred_fallthru
      _
    %v43 = vld [vmem:[#allocation2] sm:$0xff]
    %v44 = vld [vmem:[#allocation5] sm:$0xff]
    %v45 = vld [vmem:[#allocation5 + $0x8] sm:$0xff]
    %v46 = vld [vmem:[#allocation5 + $0x10] sm:$0xff]
    %v47 = vld [vmem:[#allocation5 + $0x18] sm:$0xff]
    %v48 = vld [vmem:[#allocation5 + $0x20] sm:$0xff]
    %v49 = vld [vmem:[#allocation5 + $0x28] sm:$0xff]
    %v50 = vld [vmem:[#allocation5 + $0x30] sm:$0xff]
    %v51 = vld [vmem:[#allocation5 + $0x38] sm:$0xff]
    %v52 = vld [vmem:[#allocation5 + $0x40] sm:$0xff]
    %v53 = vld [vmem:[#allocation5 + $0x48] sm:$0xff]
    %v54 = vld [vmem:[#allocation5 + $0x50] sm:$0xff]
    %v55 = vld [vmem:[#allocation5 + $0x58] sm:$0xff]
    %v56 = vld [vmem:[#allocation5 + $0x60] sm:$0xff]
    %v57 = vld [vmem:[#allocation5 + $0x68] sm:$0xff]
    %v58 = vld [vmem:[#allocation5 + $0x70] sm:$0xff]
    %v59 = vld [vmem:[#allocation5 + $0x78] sm:$0xff]
    %v60 = vld [vmem:[#allocation7] sm:$0xff]
    %61 = vmatprep.subr.mxu0 0.0
    %62 = vmatpush1.xpose.msra.mxu0 %v44
    %63 = vmatprep.subr.mxu0 0.0
    %64 = vmatpush1.xpose.msra.mxu0 %v45
    %65 = vmatprep.subr.mxu0 0.0
    %66 = vmatpush1.xpose.msra.mxu0 %v46
    %67 = vmatprep.subr.mxu0 0.0
    %68 = vmatpush1.xpose.msra.mxu0 %v47
    %69 = vmatprep.subr.mxu0 0.0
    %70 = vmatpush1.xpose.msra.mxu0 %v48
    %71 = vmatprep.subr.mxu0 0.0
    %72 = vmatpush1.xpose.msra.mxu0 %v49
    %73 = vmatprep.subr.mxu0 0.0
    %74 = vmatpush1.xpose.msra.mxu0 %v50
    %75 = vmatprep.subr.mxu0 0.0
    %76 = vmatpush1.xpose.msra.mxu0 %v51
    %77 = vmatprep.subr.mxu0 0.0
    %78 = vmatpush1.xpose.msra.mxu0 %v52
    %79 = vmatprep.subr.mxu0 0.0
    %80 = vmatpush1.xpose.msra.mxu0 %v53
    %81 = vmatprep.subr.mxu0 0.0
    %82 = vmatpush1.xpose.msra.mxu0 %v54
    %83 = vmatprep.subr.mxu0 0.0
    %84 = vmatpush1.xpose.msra.mxu0 %v55
    %85 = vmatprep.subr.mxu0 0.0
    %86 = vmatpush1.xpose.msra.mxu0 %v56
    %87 = vmatprep.subr.mxu0 0.0
    %88 = vmatpush1.xpose.msra.mxu0 %v57
    %89 = vmatprep.subr.mxu0 0.0
    %90 = vmatpush1.xpose.msra.mxu0 %v58
    %91 = vmatprep.subr.mxu0 0.0
    %92 = vmatpush1.xpose.msra.mxu0 %v59
    %93 = vmatprep.subr.mxu0 0.0
    %94 = vmatpush1.xpose.msra.mxu0 0.0
    %95 = vmatprep.subr.mxu0 0.0
    %96 = vmatpush1.xpose.msra.mxu0 0.0
    %97 = vmatprep.subr.mxu0 0.0
    %98 = vmatpush1.xpose.msra.mxu0 0.0
    %99 = vmatprep.subr.mxu0 0.0
    %100 = vmatpush1.xpose.msra.mxu0 0.0
    %101 = vmatprep.subr.mxu0 0.0
    %102 = vmatpush1.xpose.msra.mxu0 0.0
    %103 = vmatprep.subr.mxu0 0.0
    %104 = vmatpush1.xpose.msra.mxu0 0.0
    %105 = vmatprep.subr.mxu0 0.0
    %106 = vmatpush1.xpose.msra.mxu0 0.0
    %107 = vmatprep.subr.mxu0 0.0
    %108 = vmatpush1.xpose.msra.mxu0 0.0
    %109 = vmatprep.subr.mxu0 0.0
    %110 = vmatpush1.xpose.msra.mxu0 0.0
    %111 = vmatprep.subr.mxu0 0.0
    %112 = vmatpush1.xpose.msra.mxu0 0.0
    %113 = vmatprep.subr.mxu0 0.0
    %114 = vmatpush1.xpose.msra.mxu0 0.0
    %115 = vmatprep.subr.mxu0 0.0
    %116 = vmatpush1.xpose.msra.mxu0 0.0
    %117 = vmatprep.subr.mxu0 0.0
    %118 = vmatpush1.xpose.msra.mxu0 0.0
    %119 = vmatprep.subr.mxu0 0.0
    %120 = vmatpush1.xpose.msra.mxu0 0.0
    %121 = vmatprep.subr.mxu0 0.0
    %122 = vmatpush1.xpose.msra.mxu0 0.0
    %123 = vmatprep.subr.mxu0 0.0
    %124 = vmatpush1.xpose.msra.mxu0 0.0
    %125 = vmatprep.mubr.f32.mxu0 0.0
    %126 = vmatmul.mubr.f32.gmra.mrb[0].mxu0 %v43
    %v127 = vpop.f32.mrb[0].mxu0
    %v128 = vadd.f32 0.0, %v127
    %v129 = vpop.f32.mrb[0].mxu0
    %130 = vdwg.mxu0
    %v131 = vadd.f32 %v60, %v128
    %132 = vst [vmem:[#allocation7] sm:$0xff] %v131
    // Predicated region
    $region22: #{tpu_custom_call.1} parent=1 // pred_check
      _
    $region23: #{tpu_custom_call.1} parent=1 // pred_check_branch
      %134 = sbr.rel (0) target = $region25
    $region24: #{tpu_custom_call.1} parent=1 // pred_region
      %s136 = ssub.s32 128, 128
      %137 = vsyncadd [#allocation4], %s136
      %s139 = sshll.u32 [#allocation7], 4
      %s140 = int_to_ptr.vmem [resolvable:$true] %s139
      %142 = dma.vmem_to_hbm [thread:$0]  %s140, 128, %s2, [#allocation4]
    $region25: #{tpu_custom_call.1} parent=1 // pred_fallthru
      _
    // Predicated region
    $region26: #{tpu_custom_call.1} parent=1 // pred_check
      _
    $region27: #{tpu_custom_call.1} parent=1 // pred_check_branch
      %144 = sbr.rel (0) target = $region29
    $region28: #{tpu_custom_call.1} parent=1 // pred_region
      %145 = dma.done [#allocation4], 128
    $region29: #{tpu_custom_call.1} parent=1 // pred_fallthru
      _
    %146 = vsyncpa [#allocation3], 1
    %147 = vsyncpa [#allocation6], 1
    %148 = vsyncpa [#allocation4], 1

</llo_original>
